<compile_context>
chip_gen: v7x
topology: tpu7x:2x2x1
jax: 0.10.0
libtpu: 0.0.40
codegen_flags: <defaults>
</compile_context>

<pallas_src>
import jax
import jax.numpy as jnp
import numpy as np
from jax.experimental import pallas as pl
from jax.experimental.pallas import tpu as pltpu


_INPUT_VMEM_BUDGET = 28 * 1024 * 1024   # bytes for double-buffered f32 model-input blocks
_VMEM_LIMIT_BYTES = 56 * 1024 * 1024    # < v7x's 64 MiB physical; raises v5e/v6e defaults


def _qanet_output_kernel(m0_ref, m1_ref, m2_ref, mask_ref, w_ref, b_ref,
                         p1_ref, p2_ref):
    """One batch tile: logits = sum_H(M0*w_top + Mi*w_bot) + b, masked log-softmax over L."""
    m0 = m0_ref[...].astype(jnp.float32)      # (Bt, L, H)
    m1 = m1_ref[...].astype(jnp.float32)      # (Bt, L, H)
    m2 = m2_ref[...].astype(jnp.float32)      # (Bt, L, H)
    mask = mask_ref[...]                      # (Bt, L), lane-dense

    w1_top = w_ref[0]                         # (1, H)   w1[:H]
    w1_bot = w_ref[1]                         # (1, H)   w1[H:]
    w2_top = w_ref[2]                         # (1, H)   w2[:H]
    w2_bot = w_ref[3]                         # (1, H)   w2[H:]

    # Linear(2H -> 1) on cat([M0, Mi]) == sum_h(M0*w_top + Mi*w_bot) + b.
    # VPU multiply + XLU lane reduce; no narrow N=1 MXU pushes.
    logits1 = jnp.sum(m0 * w1_top + m1 * w1_bot, axis=-1) + b_ref[0]   # (Bt, L)
    logits2 = jnp.sum(m0 * w2_top + m2 * w2_bot, axis=-1) + b_ref[1]   # (Bt, L)

    def masked_log_softmax(logits):
        # util.masked_softmax(..., log_softmax=True):
        #   masked = mask*logits + (1-mask)*(-1e30); log_softmax over L (lane axis).
        masked = mask * logits + (1.0 - mask) * (-1e30)
        m = jnp.max(masked, axis=-1, keepdims=True)
        z = masked - m
        lse = jnp.log(jnp.sum(jnp.exp(z), axis=-1, keepdims=True))
        return z - lse

    p1_ref[...] = masked_log_softmax(logits1)
    p2_ref[...] = masked_log_softmax(logits2)


def _pick_batch_tile(B, L, H):
    """Largest batch tile whose double-buffered f32 inputs fit the VMEM budget."""
    per_batch = 2 * 3 * L * H * 4            # double-buffer x 3 model inputs x f32
    bt = max(1, _INPUT_VMEM_BUDGET // per_batch)
    if bt >= B:
        return B                              # whole batch in one grid step
    return max(8, (bt // 8) * 8)              # keep 2-D (Bt, L) blocks sublane-aligned


def qanet_output(M0, M1, M2, mask, w1, w2, b, *, batch_tile=None):
    """Pallas-backed QANetOutput.forward.

    M0, M1, M2: (B, L, H) float32 (or bfloat16)
    mask:       (B, L)    float32/bool (nonzero = keep)
    w1, w2:     (2H, 1)   float32  (nn.Linear(2H, 1) weights, transposed)
    b:          (2,)      float32  (biases of the two linear layers)
    returns (log_p1, log_p2): each (B, L) float32
    """
    B, L, H = M0.shape
    assert w1.shape == (2 * H, 1) and w2.shape == (2 * H, 1) and b.shape == (2,)

    if batch_tile is None:
        Bt = _pick_batch_tile(B, L, H)
    else:
        Bt = min(int(batch_tile), B)
        if Bt < B:
            Bt = max(8, (Bt // 8) * 8)
    Bp = pl.cdiv(B, Bt) * Bt

    maskf = mask.astype(jnp.float32)
    if Bp != B:                               # pad batch so the grid tiles evenly
        M0 = jnp.pad(M0, ((0, Bp - B), (0, 0), (0, 0)))
        M1 = jnp.pad(M1, ((0, Bp - B), (0, 0), (0, 0)))
        M2 = jnp.pad(M2, ((0, Bp - B), (0, 0), (0, 0)))
        maskf = jnp.pad(maskf, ((0, Bp - B), (0, 0)))

    # Pre-split the Linear(2H,1) weights into M0 / Mi halves, packed as (4, 1, H).
    W = jnp.stack([w1[:H, 0], w1[H:, 0], w2[:H, 0], w2[H:, 0]], axis=0)
    W = W.astype(jnp.float32).reshape(4, 1, H)
    bf = b.astype(jnp.float32)

    mdl_spec = pl.BlockSpec((Bt, L, H), lambda bb: (bb, 0, 0))
    row_spec = pl.BlockSpec((Bt, L), lambda bb: (bb, 0))
    w_spec = pl.BlockSpec((4, 1, H), lambda bb: (0, 0, 0))

    log_p1, log_p2 = pl.pallas_call(
        _qanet_output_kernel,
        out_shape=(jax.ShapeDtypeStruct((Bp, L), jnp.float32),
                   jax.ShapeDtypeStruct((Bp, L), jnp.float32)),
        grid=(Bp // Bt,),
        in_specs=[mdl_spec, mdl_spec, mdl_spec,                          # M0, M1, M2
                  row_spec,                                              # mask
                  w_spec,                                                # packed weights
                  pl.BlockSpec(memory_space=pltpu.MemorySpace.SMEM)],    # biases
        out_specs=(row_spec, row_spec),
        compiler_params=pltpu.CompilerParams(
            dimension_semantics=("parallel",),        # batch axis shards across TCs (v7x)
            vmem_limit_bytes=_VMEM_LIMIT_BYTES),
    )(M0, M1, M2, maskf, W, bf)

    if Bp != B:
        log_p1 = log_p1[:B]
        log_p2 = log_p2[:B]
    return log_p1, log_p2


def _reference(M0, M1, M2, mask, w1, w2, b):
    """Plain-JAX reference mirroring the PyTorch forward."""
    maskf = mask.astype(jnp.float32)
    logits1 = jnp.concatenate([M0, M1], axis=-1) @ w1[:, 0] + b[0]  # (B, L)
    logits2 = jnp.concatenate([M0, M2], axis=-1) @ w2[:, 0] + b[1]  # (B, L)

    def mls(logits):
        masked = maskf * logits + (1.0 - maskf) * (-1e30)
        return jax.nn.log_softmax(masked, axis=-1)

    return mls(logits1), mls(logits2)


def _run_case(B, L, H, *, batch_tile=None):
    key = jax.random.PRNGKey(0)
    k0, k1, k2, kw1, kw2, kb, kl = jax.random.split(key, 7)

    M0 = jax.random.normal(k0, (B, L, H), jnp.float32)
    M1 = jax.random.normal(k1, (B, L, H), jnp.float32)
    M2 = jax.random.normal(k2, (B, L, H), jnp.float32)

    # mask: first `length` positions are real, rest padded
    lengths = jax.random.randint(kl, (B,), L // 2, L + 1)
    mask = (jnp.arange(L)[None, :] < lengths[:, None]).astype(jnp.float32)

    # nn.Linear(2H, 1, bias=True)-shaped parameters.
    w1 = jax.random.normal(kw1, (2 * H, 1), jnp.float32) * 0.1
    w2 = jax.random.normal(kw2, (2 * H, 1), jnp.float32) * 0.1
    b = jax.random.normal(kb, (2,), jnp.float32) * 0.1

    log_p1, log_p2 = qanet_output(M0, M1, M2, mask, w1, w2, b, batch_tile=batch_tile)
    jax.block_until_ready((log_p1, log_p2))

    ref_p1, ref_p2 = _reference(M0, M1, M2, mask, w1, w2, b)
    np.testing.assert_allclose(np.asarray(log_p1), np.asarray(ref_p1), rtol=1e-3, atol=1e-5)
    np.testing.assert_allclose(np.asarray(log_p2), np.asarray(ref_p2), rtol=1e-3, atol=1e-5)


if __name__ == "__main__":
    # Small baseline shape (single grid step, whole batch per block).
    _run_case(2, 8, 32)
    # Exercise batch tiling + padding path (B=12 -> padded to 16, two grid steps of 8).
    _run_case(12, 8, 32, batch_tile=8)
    print("KERNEL_OK")
</pallas_src>

<mosaic_0001>
module attributes {stable_mosaic.version = 11 : i64} {
  func.func @_qanet_output_kernel(%arg0: i32, %arg1: memref<2x8x32xf32, #tpu.memory_space<vmem>>, %arg2: memref<2x8x32xf32, #tpu.memory_space<vmem>>, %arg3: memref<2x8x32xf32, #tpu.memory_space<vmem>>, %arg4: memref<2x8xf32, #tpu.memory_space<vmem>>, %arg5: memref<4x1x32xf32, #tpu.memory_space<vmem>>, %arg6: memref<2xf32, #tpu.memory_space<smem>>, %arg7: memref<2x8xf32, #tpu.memory_space<vmem>>, %arg8: memref<2x8xf32, #tpu.memory_space<vmem>>) attributes {dimension_semantics = [#tpu.dimension_semantics<parallel>], iteration_bounds = array<i64: 1>, scalar_prefetch = 0 : i64, scratch_operands = 0 : i64, tpu.core_type = #tpu.core_type<tc>, window_params = [{transform_indices = @transform_0, window_bounds = array<i64: 2, 8, 32>}, {transform_indices = @transform_1, window_bounds = array<i64: 2, 8, 32>}, {transform_indices = @transform_2, window_bounds = array<i64: 2, 8, 32>}, {transform_indices = @transform_3, window_bounds = array<i64: 2, 8>}, {pipeline_mode = #tpu.pipeline_mode<synchronous>, transform_indices = @transform_4, window_bounds = array<i64: 4, 1, 32>}, {transform_indices = @transform_5, window_bounds = array<i64: 2>}, {transform_indices = @transform_6, window_bounds = array<i64: 2, 8>}, {transform_indices = @transform_7, window_bounds = array<i64: 2, 8>}]} {
    %c0 = arith.constant 0 : index
    %c0_0 = arith.constant 0 : index
    %c0_1 = arith.constant 0 : index
    %0 = vector.load %arg1[%c0, %c0_0, %c0_1] : memref<2x8x32xf32, #tpu.memory_space<vmem>>, vector<2x8x32xf32>
    %c0_2 = arith.constant 0 : index
    %c0_3 = arith.constant 0 : index
    %c0_4 = arith.constant 0 : index
    %1 = vector.load %arg2[%c0_2, %c0_3, %c0_4] : memref<2x8x32xf32, #tpu.memory_space<vmem>>, vector<2x8x32xf32>
    %c0_5 = arith.constant 0 : index
    %c0_6 = arith.constant 0 : index
    %c0_7 = arith.constant 0 : index
    %2 = vector.load %arg3[%c0_5, %c0_6, %c0_7] : memref<2x8x32xf32, #tpu.memory_space<vmem>>, vector<2x8x32xf32>
    %c0_8 = arith.constant 0 : index
    %c0_9 = arith.constant 0 : index
    %3 = vector.load %arg4[%c0_8, %c0_9] : memref<2x8xf32, #tpu.memory_space<vmem>>, vector<2x8xf32>
    %c0_10 = arith.constant 0 : index
    %c0_11 = arith.constant 0 : index
    %c0_12 = arith.constant 0 : index
    %4 = vector.load %arg5[%c0_10, %c0_11, %c0_12] : memref<4x1x32xf32, #tpu.memory_space<vmem>>, vector<1x1x32xf32>
    %5 = vector.shape_cast %4 : vector<1x1x32xf32> to vector<1x32xf32>
    %c1 = arith.constant 1 : index
    %c0_13 = arith.constant 0 : index
    %c0_14 = arith.constant 0 : index
    %6 = vector.load %arg5[%c1, %c0_13, %c0_14] : memref<4x1x32xf32, #tpu.memory_space<vmem>>, vector<1x1x32xf32>
    %7 = vector.shape_cast %6 : vector<1x1x32xf32> to vector<1x32xf32>
    %c2 = arith.constant 2 : index
    %c0_15 = arith.constant 0 : index
    %c0_16 = arith.constant 0 : index
    %8 = vector.load %arg5[%c2, %c0_15, %c0_16] : memref<4x1x32xf32, #tpu.memory_space<vmem>>, vector<1x1x32xf32>
    %9 = vector.shape_cast %8 : vector<1x1x32xf32> to vector<1x32xf32>
    %c3 = arith.constant 3 : index
    %c0_17 = arith.constant 0 : index
    %c0_18 = arith.constant 0 : index
    %10 = vector.load %arg5[%c3, %c0_17, %c0_18] : memref<4x1x32xf32, #tpu.memory_space<vmem>>, vector<1x1x32xf32>
    %11 = vector.shape_cast %10 : vector<1x1x32xf32> to vector<1x32xf32>
    %12 = vector.shape_cast %5 : vector<1x32xf32> to vector<1x1x32xf32>
    %13 = vector.broadcast %12 : vector<1x1x32xf32> to vector<2x8x32xf32>
    %14 = arith.mulf %0, %13 : vector<2x8x32xf32>
    %15 = vector.shape_cast %7 : vector<1x32xf32> to vector<1x1x32xf32>
    %16 = vector.broadcast %15 : vector<1x1x32xf32> to vector<2x8x32xf32>
    %17 = arith.mulf %1, %16 : vector<2x8x32xf32>
    %18 = arith.addf %14, %17 : vector<2x8x32xf32>
    %cst = arith.constant dense<0.000000e+00> : vector<2x8xf32>
    %19 = vector.multi_reduction <add>, %18, %cst [2] : vector<2x8x32xf32> to vector<2x8xf32>
    %c0_19 = arith.constant 0 : index
    %20 = memref.load %arg6[%c0_19] : memref<2xf32, #tpu.memory_space<smem>>
    %21 = vector.broadcast %20 : f32 to vector<2x8xf32>
    %22 = arith.addf %19, %21 : vector<2x8xf32>
    %23 = vector.shape_cast %9 : vector<1x32xf32> to vector<1x1x32xf32>
    %24 = vector.broadcast %23 : vector<1x1x32xf32> to vector<2x8x32xf32>
    %25 = arith.mulf %0, %24 : vector<2x8x32xf32>
    %26 = vector.shape_cast %11 : vector<1x32xf32> to vector<1x1x32xf32>
    %27 = vector.broadcast %26 : vector<1x1x32xf32> to vector<2x8x32xf32>
    %28 = arith.mulf %2, %27 : vector<2x8x32xf32>
    %29 = arith.addf %25, %28 : vector<2x8x32xf32>
    %cst_20 = arith.constant dense<0.000000e+00> : vector<2x8xf32>
    %30 = vector.multi_reduction <add>, %29, %cst_20 [2] : vector<2x8x32xf32> to vector<2x8xf32>
    %c1_21 = arith.constant 1 : index
    %31 = memref.load %arg6[%c1_21] : memref<2xf32, #tpu.memory_space<smem>>
    %32 = vector.broadcast %31 : f32 to vector<2x8xf32>
    %33 = arith.addf %30, %32 : vector<2x8xf32>
    %34 = arith.mulf %3, %22 : vector<2x8xf32>
    %cst_22 = arith.constant 1.000000e+00 : f32
    %35 = vector.broadcast %cst_22 : f32 to vector<2x8xf32>
    %36 = arith.subf %35, %3 : vector<2x8xf32>
    %cst_23 = arith.constant -1.000000e+30 : f32
    %37 = vector.broadcast %cst_23 : f32 to vector<2x8xf32>
    %38 = arith.mulf %36, %37 : vector<2x8xf32>
    %39 = arith.addf %34, %38 : vector<2x8xf32>
    %cst_24 = arith.constant dense<0xFF800000> : vector<2xf32>
    %40 = vector.multi_reduction <maximumf>, %39, %cst_24 [1] : vector<2x8xf32> to vector<2xf32>
    %41 = vector.shape_cast %40 : vector<2xf32> to vector<2x1xf32>
    %42 = vector.broadcast %41 : vector<2x1xf32> to vector<2x8xf32>
    %43 = arith.subf %39, %42 : vector<2x8xf32>
    %44 = math.exp %43 : vector<2x8xf32>
    %cst_25 = arith.constant dense<0.000000e+00> : vector<2xf32>
    %45 = vector.multi_reduction <add>, %44, %cst_25 [1] : vector<2x8xf32> to vector<2xf32>
    %46 = vector.shape_cast %45 : vector<2xf32> to vector<2x1xf32>
    %47 = math.log %46 : vector<2x1xf32>
    %48 = vector.broadcast %47 : vector<2x1xf32> to vector<2x8xf32>
    %49 = arith.subf %43, %48 : vector<2x8xf32>
    %c0_26 = arith.constant 0 : index
    %c0_27 = arith.constant 0 : index
    %50 = vector.load %arg7[%c0_26, %c0_27] : memref<2x8xf32, #tpu.memory_space<vmem>>, vector<2x8xf32>
    tpu.vector_store %arg7[%c0_26, %c0_27], %49 {strides = array<i32>} : memref<2x8xf32, #tpu.memory_space<vmem>>, vector<2x8xf32>,
    %51 = arith.mulf %3, %33 : vector<2x8xf32>
    %cst_28 = arith.constant 1.000000e+00 : f32
    %52 = vector.broadcast %cst_28 : f32 to vector<2x8xf32>
    %53 = arith.subf %52, %3 : vector<2x8xf32>
    %cst_29 = arith.constant -1.000000e+30 : f32
    %54 = vector.broadcast %cst_29 : f32 to vector<2x8xf32>
    %55 = arith.mulf %53, %54 : vector<2x8xf32>
    %56 = arith.addf %51, %55 : vector<2x8xf32>
    %cst_30 = arith.constant dense<0xFF800000> : vector<2xf32>
    %57 = vector.multi_reduction <maximumf>, %56, %cst_30 [1] : vector<2x8xf32> to vector<2xf32>
    %58 = vector.shape_cast %57 : vector<2xf32> to vector<2x1xf32>
    %59 = vector.broadcast %58 : vector<2x1xf32> to vector<2x8xf32>
    %60 = arith.subf %56, %59 : vector<2x8xf32>
    %61 = math.exp %60 : vector<2x8xf32>
    %cst_31 = arith.constant dense<0.000000e+00> : vector<2xf32>
    %62 = vector.multi_reduction <add>, %61, %cst_31 [1] : vector<2x8xf32> to vector<2xf32>
    %63 = vector.shape_cast %62 : vector<2xf32> to vector<2x1xf32>
    %64 = math.log %63 : vector<2x1xf32>
    %65 = vector.broadcast %64 : vector<2x1xf32> to vector<2x8xf32>
    %66 = arith.subf %60, %65 : vector<2x8xf32>
    %c0_32 = arith.constant 0 : index
    %c0_33 = arith.constant 0 : index
    %67 = vector.load %arg8[%c0_32, %c0_33] : memref<2x8xf32, #tpu.memory_space<vmem>>, vector<2x8xf32>
    tpu.vector_store %arg8[%c0_32, %c0_33], %66 {strides = array<i32>} : memref<2x8xf32, #tpu.memory_space<vmem>>, vector<2x8xf32>,
    return
  }
  func.func @transform_0(%arg0: i32) -> (i32, i32, i32) {
    %c0_i32 = arith.constant 0 : i32
    %c0_i32_0 = arith.constant 0 : i32
    %c0_i32_1 = arith.constant 0 : i32
    return %arg0, %c0_i32, %c0_i32_0 : i32, i32, i32
  }
  func.func @transform_1(%arg0: i32) -> (i32, i32, i32) {
    %c0_i32 = arith.constant 0 : i32
    %c0_i32_0 = arith.constant 0 : i32
    %c0_i32_1 = arith.constant 0 : i32
    return %arg0, %c0_i32, %c0_i32_0 : i32, i32, i32
  }
  func.func @transform_2(%arg0: i32) -> (i32, i32, i32) {
    %c0_i32 = arith.constant 0 : i32
    %c0_i32_0 = arith.constant 0 : i32
    %c0_i32_1 = arith.constant 0 : i32
    return %arg0, %c0_i32, %c0_i32_0 : i32, i32, i32
  }
  func.func @transform_3(%arg0: i32) -> (i32, i32) {
    %c0_i32 = arith.constant 0 : i32
    %c0_i32_0 = arith.constant 0 : i32
    return %arg0, %c0_i32 : i32, i32
  }
  func.func @transform_4(%arg0: i32) -> (i32, i32, i32) {
    %c0_i32 = arith.constant 0 : i32
    %c0_i32_0 = arith.constant 0 : i32
    %c0_i32_1 = arith.constant 0 : i32
    %c0_i32_2 = arith.constant 0 : i32
    return %c0_i32, %c0_i32_0, %c0_i32_1 : i32, i32, i32
  }
  func.func @transform_5(%arg0: i32) -> i32 {
    %c0_i32 = arith.constant 0 : i32
    %c0_i32_0 = arith.constant 0 : i32
    return %c0_i32 : i32
  }
  func.func @transform_6(%arg0: i32) -> (i32, i32) {
    %c0_i32 = arith.constant 0 : i32
    %c0_i32_0 = arith.constant 0 : i32
    return %arg0, %c0_i32 : i32, i32
  }
  func.func @transform_7(%arg0: i32) -> (i32, i32) {
    %c0_i32 = arith.constant 0 : i32
    %c0_i32_0 = arith.constant 0 : i32
    return %arg0, %c0_i32 : i32, i32
  }
}

</mosaic_0001>

<llo_original>
// kernel: tpu_custom_call.1
$region0: #{tpu_custom_call.1}
  #allocation0 [shape = 'u32[]', space=smem, size = 0x4, offset = 0x4, fixed_abs, tag = 'smem constant byte address 0x4 - core index']
  #allocation1 [shape = 'u32[144,128]{1,0:T(1,128)}', space=vmem, size = 0x12000, scoped, tag = 'internal scratch']
  %s0 = inlined_call_operand.hbm [shape: f32[2,8,32], index: 0, kind: input, shape index: {}]
  %s1 = inlined_call_operand.hbm [shape: f32[2,8,32], index: 1, kind: input, shape index: {}]
  %s2 = inlined_call_operand.hbm [shape: f32[2,8,32], index: 2, kind: input, shape index: {}]
  %s3 = inlined_call_operand.vmem [shape: f32[2,8], index: 3, kind: input, shape index: {}]
  %s4 = inlined_call_operand.vmem [shape: f32[4,1,32], index: 4, kind: input, shape index: {}]
  %s5 = inlined_call_operand.vmem [shape: f32[2], index: 5, kind: input, shape index: {}]
  %s6 = inlined_call_operand.hbm [shape: f32[2,8], index: 6, kind: output, shape index: {0}]
  %s7 = inlined_call_operand.hbm [shape: f32[2,8], index: 7, kind: output, shape index: {1}]
  %8 = xla_tuple %s6, %s7
  %s9 = sld [smem:[#allocation0]]
  $region58: #{tpu_custom_call.1} parent=0
    _
  %s11 = ssub.s32 1, %s9
  %s12 = scalar_select 0, %s11, %s9
  $region1: #{tpu_custom_call.1} parent=0
    #allocation2 [shape = 'u8[8192]{0}', space=vmem, size = 0x2000, scoped, tag = 'input window, operand 0, single buffered']
    #allocation3 [shape = 's32[1]{0}', space=sflag, size = 0x4, scoped, tag = 'scoped memory for tpu_custom_call.1']
    #allocation4 [shape = 's32[1]{0}', space=sflag, size = 0x4, scoped, tag = 'scoped memory for tpu_custom_call.1']
    #allocation5 [shape = 's32[1]{0}', space=sflag, size = 0x4, scoped, tag = 'scoped memory for tpu_custom_call.1']
    #allocation6 [shape = 'u8[8192]{0}', space=vmem, size = 0x2000, scoped, tag = 'input window, operand 1, single buffered']
    #allocation7 [shape = 's32[1]{0}', space=sflag, size = 0x4, scoped, tag = 'scoped memory for tpu_custom_call.1']
    #allocation8 [shape = 'u8[8192]{0}', space=vmem, size = 0x2000, scoped, tag = 'input window, operand 2, single buffered']
    #allocation9 [shape = 'u8[512]{0}', space=smem, size = 0x200, scoped, tag = 'input window, operand 5, single buffered']
    #allocation10 [shape = 'u8[1024]{0}', space=vmem, size = 0x400, scoped, tag = 'output window, operand 0, single buffered']
    #allocation11 [shape = 'u8[1024]{0}', space=vmem, size = 0x400, scoped, tag = 'output window, operand 1, single buffered']
    #allocation12 [shape = 's32[1]{0}', space=sflag, size = 0x4, scoped, tag = 'scoped memory for tpu_custom_call.1']
    %13 = vsyncpa [#allocation3], 0
    %14 = vsyncpa [#allocation7], 0
    %15 = vsyncpa [#allocation5], 0
    %16 = vsyncpa [#allocation4], 0
    %17 = vsyncpa [#allocation12], 0
    // Predicated region
    $region2: #{tpu_custom_call.1} parent=1 // pred_check
      _
    $region3: #{tpu_custom_call.1} parent=1 // pred_check_branch
      %19 = sbr.rel (0) target = $region5
    $region4: #{tpu_custom_call.1} parent=1 // pred_region
      %s21 = ssub.s32 256, 256
      %22 = vsyncadd [#allocation3], %s21
      %s23 = sshll.u32 [#allocation2], 4
      %s24 = int_to_ptr.vmem [resolvable:$true] %s23
      %29 = dma.hbm_to_vmem [thread:$0]  %s0, 256, %s24, [#allocation3], 128, 128, 8
    $region5: #{tpu_custom_call.1} parent=1 // pred_fallthru
      _
    // Predicated region
    $region6: #{tpu_custom_call.1} parent=1 // pred_check
      _
    $region7: #{tpu_custom_call.1} parent=1 // pred_check_branch
      %31 = sbr.rel (0) target = $region9
    $region8: #{tpu_custom_call.1} parent=1 // pred_region
      %s33 = ssub.s32 256, 256
      %34 = vsyncadd [#allocation7], %s33
      %s35 = sshll.u32 [#allocation6], 4
      %s36 = int_to_ptr.vmem [resolvable:$true] %s35
      %41 = dma.hbm_to_vmem [thread:$0]  %s1, 256, %s36, [#allocation7], 128, 128, 8
    $region9: #{tpu_custom_call.1} parent=1 // pred_fallthru
      _
    // Predicated region
    $region10: #{tpu_custom_call.1} parent=1 // pred_check
      _
    $region11: #{tpu_custom_call.1} parent=1 // pred_check_branch
      %43 = sbr.rel (0) target = $region13
    $region12: #{tpu_custom_call.1} parent=1 // pred_region
      %s45 = ssub.s32 256, 256
      %46 = vsyncadd [#allocation7], %s45
      %s47 = sshll.u32 [#allocation8], 4
      %s48 = int_to_ptr.vmem [resolvable:$true] %s47
      %53 = dma.hbm_to_vmem [thread:$0]  %s2, 256, %s48, [#allocation7], 128, 128, 8
    $region13: #{tpu_custom_call.1} parent=1 // pred_fallthru
      _
    // Predicated region
    $region14: #{tpu_custom_call.1} parent=1 // pred_check
      _
    $region15: #{tpu_custom_call.1} parent=1 // pred_check_branch
      %55 = sbr.rel (0) target = $region17
    $region16: #{tpu_custom_call.1} parent=1 // pred_region
      _
    $region17: #{tpu_custom_call.1} parent=1 // pred_fallthru
      _
    // Predicated region
    $region18: #{tpu_custom_call.1} parent=1 // pred_check
      _
    $region19: #{tpu_custom_call.1} parent=1 // pred_check_branch
      %57 = sbr.rel (0) target = $region21
    $region20: #{tpu_custom_call.1} parent=1 // pred_region
      _
    $region21: #{tpu_custom_call.1} parent=1 // pred_fallthru
      _
    // Predicated region
    $region22: #{tpu_custom_call.1} parent=1 // pred_check
      _
    $region23: #{tpu_custom_call.1} parent=1 // pred_check_branch
      %59 = sbr.rel (0) target = $region25
    $region24: #{tpu_custom_call.1} parent=1 // pred_region
      %s61 = ssub.s32 16, 16
      %62 = vsyncadd [#allocation5], %s61
      %s64 = sshll.u32 %s5, 4
      %s65 = int_to_ptr.vmem [resolvable:$true] %s64
      %67 = dma.vmem_to_smem %s65, 16, [#allocation9], [#allocation5]
    $region25: #{tpu_custom_call.1} parent=1 // pred_fallthru
      _
    // Predicated region
    $region26: #{tpu_custom_call.1} parent=1 // pred_check
      _
    $region27: #{tpu_custom_call.1} parent=1 // pred_check_branch
      %69 = sbr.rel (0) target = $region29
    $region28: #{tpu_custom_call.1} parent=1 // pred_region
      %70 = dma.done [#allocation3], 256
    $region29: #{tpu_custom_call.1} parent=1 // pred_fallthru
      _
    // Predicated region
    $region30: #{tpu_custom_call.1} parent=1 // pred_check
      _
    $region31: #{tpu_custom_call.1} parent=1 // pred_check_branch
      %72 = sbr.rel (0) target = $region33
    $region32: #{tpu_custom_call.1} parent=1 // pred_region
      %73 = dma.done [#allocation7], 256
    $region33: #{tpu_custom_call.1} parent=1 // pred_fallthru
      _
    // Predicated region
    $region34: #{tpu_custom_call.1} parent=1 // pred_check
      _
    $region35: #{tpu_custom_call.1} parent=1 // pred_check_branch
      %75 = sbr.rel (0) target = $region37
    $region36: #{tpu_custom_call.1} parent=1 // pred_region
      %76 = dma.done [#allocation7], 256
    $region37: #{tpu_custom_call.1} parent=1 // pred_fallthru
      _
    // Predicated region
    $region38: #{tpu_custom_call.1} parent=1 // pred_check
      _
    $region39: #{tpu_custom_call.1} parent=1 // pred_check_branch
      %78 = sbr.rel (0) target = $region41
    $region40: #{tpu_custom_call.1} parent=1 // pred_region
      %79 = dma.done [#allocation5], 16
    $region41: #{tpu_custom_call.1} parent=1 // pred_fallthru
      _
    %80 = sfence
    %v81 = vld [vmem:[#allocation2] sm:$0xff]
    %v82 = vld [vmem:[#allocation2 + $0x8] sm:$0xff]
    %v83 = vld [vmem:[#allocation6] sm:$0xff]
    %v84 = vld [vmem:[#allocation6 + $0x8] sm:$0xff]
    %v85 = vld [vmem:[#allocation8] sm:$0xff]
    %v86 = vld [vmem:[#allocation8 + $0x8] sm:$0xff]
    %v87 = vld [vmem:[%s3] sm:$0x3]
    %v88 = vld [vmem:[%s4] sm:$0x1]
    %s89 = scalar_lea.vmem %s4, 1
    %v90 = vld [vmem:[%s89] sm:$0x1]
    %s91 = scalar_lea.vmem %s4, 2
    %v92 = vld [vmem:[%s91] sm:$0x1]
    %s93 = scalar_lea.vmem %s4, 3
    %v94 = vld [vmem:[%s93] sm:$0x1]
    %v96 = vlaneseq
    %v97 = vshrl.u32 %v96, 7
    %v98 = vsub.s32 0, %v97
    %v99 = vrot.slane %v88, %v98
    %v101 = vmul.f32 %v81, %v99
    %v102 = vmul.f32 %v82, %v99
    %v104 = vlaneseq
    %v105 = vshrl.u32 %v104, 7
    %v106 = vsub.s32 0, %v105
    %v107 = vrot.slane %v90, %v106
    %v109 = vmul.f32 %v83, %v107
    %v110 = vmul.f32 %v84, %v107
    %v111 = vadd.f32 %v101, %v109
    %v112 = vadd.f32 %v102, %v110
    %vm113 = vcmask 261120
    %v114 = vsel %vm113, %v111, 0.0
    %115 = vadd.xlane.f32.xlu0 %v114
    %v116 = vpop.xlane.xlu0 %115
    %v117 = vsel %vm113, %v112, 0.0
    %118 = vadd.xlane.f32.xlu0 %v117
    %v119 = vpop.xlane.xlu0 %118
    %s120 = sld [smem:[#allocation9]]
    %v121 = vstv %s120
    %v122 = vadd.f32 %v116, %v121
    %v123 = vadd.f32 %v119, %v121
    %v125 = vlaneseq
    %v126 = vshrl.u32 %v125, 7
    %v127 = vsub.s32 0, %v126
    %v128 = vrot.slane %v92, %v127
    %v130 = vmul.f32 %v81, %v128
    %v131 = vmul.f32 %v82, %v128
    %v133 = vlaneseq
    %v134 = vshrl.u32 %v133, 7
    %v135 = vsub.s32 0, %v134
    %v136 = vrot.slane %v94, %v135
    %v138 = vmul.f32 %v85, %v136
    %v139 = vmul.f32 %v86, %v136
    %v140 = vadd.f32 %v130, %v138
    %v141 = vadd.f32 %v131, %v139
    %v142 = vsel %vm113, %v140, 0.0
    %143 = vadd.xlane.f32.xlu0 %v142
    %v144 = vpop.xlane.xlu0 %143
    %v145 = vsel %vm113, %v141, 0.0
    %146 = vadd.xlane.f32.xlu0 %v145
    %v147 = vpop.xlane.xlu0 %146
    %s148 = sld [smem:[#allocation9 + $0x1]]
    %v149 = vstv %s148
    %v150 = vadd.f32 %v144, %v149
    %v151 = vadd.f32 %v147, %v149
    %v154 = vlaneseq
    %v155 = vand.u32 %v154, 127
    %v156 = vlaneseq
    %v157 = vshrl.u32 %v156, 7
    %v158 = vsub.s32 %v155, %v157
    %v159 = vrot.slane %v122, %v158
    %v160 = vlaneseq
    %v161 = vshrl.u32 %v160, 7
    %v162 = vsub.s32 %v155, %v161
    %v163 = vrot.slane %v123, %v162
    %vm164 = vcmask 1041409
    %v165 = vsel %vm164, %v163, %v159
    %v167 = vmul.f32 %v87, %v165
    %v168 = vsub.f32 1.0, %v87
    %v169 = vmul.f32 %v168, -1e+30
    %v170 = vadd.f32 %v167, %v169
    %vm171 = vcmask 58368
    %v172 = vsel %vm171, %v170, -inf
    %173 = vmax.xlane.f32.xlu0 %v172
    %v174 = vpop.xlane.xlu0 %173
    %v175 = vsub.f32 %v170, %v174
    %v176 = vmul.f32 %v175, 1.442695
    %v177 = vpow.pop %v176
    %v178 = vsel %vm171, %v177, 0.0
    %179 = vadd.xlane.f32.xlu0 %v178
    %v180 = vpop.xlane.xlu0 %179
    %v181 = vlog2.pop %v180
    %v182 = vmul.f32 %v181, 0.6931472
    %v183 = vsub.f32 %v175, %v182
    %184 = vst.msk [vmem:[#allocation10] sm:$0x3] %vm171, %v183
    %v187 = vlaneseq
    %v188 = vshrl.u32 %v187, 7
    %v189 = vsub.s32 %v155, %v188
    %v190 = vrot.slane %v150, %v189
    %v191 = vlaneseq
    %v192 = vshrl.u32 %v191, 7
    %v193 = vsub.s32 %v155, %v192
    %v194 = vrot.slane %v151, %v193
    %v195 = vsel %vm164, %v194, %v190
    %v197 = vmul.f32 %v87, %v195
    %v198 = vadd.f32 %v197, %v169
    %v199 = vsel %vm171, %v198, -inf
    %200 = vmax.xlane.f32.xlu0 %v199
    %v201 = vpop.xlane.xlu0 %200
    %v202 = vsub.f32 %v198, %v201
    %v203 = vmul.f32 %v202, 1.442695
    %v204 = vpow.pop %v203
    %v205 = vsel %vm171, %v204, 0.0
    %206 = vadd.xlane.f32.xlu0 %v205
    %v207 = vpop.xlane.xlu0 %206
    %v208 = vlog2.pop %v207
    %v209 = vmul.f32 %v208, 0.6931472
    %v210 = vsub.f32 %v202, %v209
    %211 = vst.msk [vmem:[#allocation11] sm:$0x3] %vm171, %v210
    // Predicated region
    $region42: #{tpu_custom_call.1} parent=1 // pred_check
      _
    $region43: #{tpu_custom_call.1} parent=1 // pred_check_branch
      %213 = sbr.rel (0) target = $region45
    $region44: #{tpu_custom_call.1} parent=1 // pred_region
      %s215 = ssub.s32 32, 32
      %216 = vsyncadd [#allocation4], %s215
      %s218 = sshll.u32 [#allocation10], 4
      %s219 = int_to_ptr.vmem [resolvable:$true] %s218
      %221 = dma.vmem_to_hbm [thread:$0]  %s219, 32, %s6, [#allocation4]
    $region45: #{tpu_custom_call.1} parent=1 // pred_fallthru
      _
    // Predicated region
    $region46: #{tpu_custom_call.1} parent=1 // pred_check
      _
    $region47: #{tpu_custom_call.1} parent=1 // pred_check_branch
      %223 = sbr.rel (0) target = $region49
    $region48: #{tpu_custom_call.1} parent=1 // pred_region
      %s225 = ssub.s32 32, 32
      %226 = vsyncadd [#allocation12], %s225
      %s228 = sshll.u32 [#allocation11], 4
      %s229 = int_to_ptr.vmem [resolvable:$true] %s228
      %231 = dma.vmem_to_hbm [thread:$0]  %s229, 32, %s7, [#allocation12]
    $region49: #{tpu_custom_call.1} parent=1 // pred_fallthru
      _
    // Predicated region
    $region50: #{tpu_custom_call.1} parent=1 // pred_check
      _
    $region51: #{tpu_custom_call.1} parent=1 // pred_check_branch
      %233 = sbr.rel (0) target = $region53
    $region52: #{tpu_custom_call.1} parent=1 // pred_region
      %234 = dma.done [#allocation4], 32
    $region53: #{tpu_custom_call.1} parent=1 // pred_fallthru
      _
    // Predicated region
    $region54: #{tpu_custom_call.1} parent=1 // pred_check
      _
    $region55: #{tpu_custom_call.1} parent=1 // pred_check_branch
      %236 = sbr.rel (0) target = $region57
    $region56: #{tpu_custom_call.1} parent=1 // pred_region
      %237 = dma.done [#allocation12], 32
    $region57: #{tpu_custom_call.1} parent=1 // pred_fallthru
      _
    %238 = vsyncpa [#allocation3], 1
    %239 = vsyncpa [#allocation7], 1
    %240 = vsyncpa [#allocation4], 1
    %241 = vsyncpa [#allocation12], 1
    %242 = vsyncpa [#allocation5], 1

</llo_original>
